<compile_context>
chip_gen: v6e
topology: v6e:2x2x1
jax: 0.10.0
libtpu: 0.0.40
codegen_flags: <defaults>
</compile_context>

<pallas_src>
import functools

import jax
import jax.numpy as jnp
from jax.experimental import pallas as pl
from jax.experimental.pallas import tpu as pltpu


def _round_up(x, m):
    return (x + m - 1) // m * m


def _cdiv(a, b):
    return -(-a // b)


def _gelu_tanh(x):
    # PyTorch F.gelu(..., approximate='tanh'):
    # 0.5 * x * (1 + tanh(sqrt(2/pi) * (x + 0.044715 * x^3)))
    c = 0.7978845608028654  # sqrt(2/pi)
    return 0.5 * x * (1.0 + jnp.tanh(c * (x + 0.044715 * x * x * x)))


def _vmem_capacity_bytes():
    """Per-core VMEM capacity (generation-aware); conservative fallback 64 MiB."""
    try:
        return int(pltpu.get_tpu_info().vmem_capacity_bytes)
    except Exception:
        return 64 * 2**20  # v7x per-core size; safe lower bound everywhere


def prepare_params(w1, b1, w2, b2, *, ti=512):
    """Pad parameters once (lane-dense 128-aligned minor dims, ti-aligned I).

    Hoist this to parameter-load time in production so no per-call weight
    copies go through HBM.  Zero padding keeps the math exact: padded W1
    columns produce gelu(0)=0, and padded W2 rows are zero, so padded I
    channels contribute nothing.
    """
    H, I = w1.shape
    Hp = _round_up(H, 128)
    Ip128 = _round_up(I, 128)
    ti_eff = min(_round_up(ti, 128), Ip128)
    Ip = _round_up(Ip128, ti_eff)  # I padded so ti_eff divides it exactly

    w1p = jnp.pad(w1, ((0, Hp - H), (0, Ip - I)))
    b1p = jnp.pad(b1, ((0, Ip - I),)).reshape(1, Ip)
    w2p = jnp.pad(w2, ((0, Ip - I), (0, Hp - H)))
    b2p = jnp.pad(b2, ((0, Hp - H),)).reshape(1, Hp)
    return w1p, b1p, w2p, b2p, ti_eff


def _mlp_kernel(x_ref, w1_ref, b1_ref, w2_ref, b2_ref, o_ref, acc_ref):
    # Grid: (row tiles, intermediate-dim chunks).  Per step:
    #   x_ref : (tm, Hp)     w1_ref: (Hp, ti)   b1_ref: (1, ti)
    #   w2_ref: (ti, Hp)     b2_ref: (1, Hp)    acc_ref: (tm, Hp) f32 scratch
    k = pl.program_id(1)
    nk = pl.num_programs(1)

    # fc1 chunk: native-dtype operands, f32 accumulation on the MXU.
    h = jnp.dot(x_ref[...], w1_ref[...], preferred_element_type=jnp.float32)
    h = h + b1_ref[...].astype(jnp.float32)  # broadcast over rows
    h = _gelu_tanh(h)                        # f32; tanh uses the EUP slot
    # Cast the intermediate to the weight dtype (no-op for f32; bf16 feeds the
    # MXU at bf16 rate and halves vreg pressure when running bf16).
    h = h.astype(w2_ref.dtype)

    # fc2 chunk: partial product accumulated into the f32 scratch.
    partial = jnp.dot(h, w2_ref[...], preferred_element_type=jnp.float32)

    @pl.when(k == 0)
    def _():
        acc_ref[...] = partial

    @pl.when(k != 0)
    def _():
        acc_ref[...] += partial

    @pl.when(k == nk - 1)
    def _():
        o_ref[...] = (acc_ref[...] + b2_ref[...].astype(jnp.float32)).astype(o_ref.dtype)


@functools.partial(jax.jit, static_argnames=("tm", "ti", "vmem_cap"))
def _decoder_mlp_impl(x, w1p, b1p, w2p, b2p, *, tm, ti, vmem_cap):
    B, N, H = x.shape
    Hp, Ip = w1p.shape
    M = B * N

    xdt = x.dtype.itemsize
    wdt = w1p.dtype.itemsize

    # Row tile: dtype-dependent sublane multiple (8 f32 / 16 bf16 / 32 int8).
    sub = max(8, 32 // xdt)
    Mp = _round_up(M, sub)                       # sublane padding only (tiny)
    tm_eff = min(_round_up(tm, sub), Mp)
    # v7x megacore: if one tile would cover a large M, split so the "parallel"
    # M axis has >= 2 grid steps and both TensorCores get work.
    if Mp <= tm_eff and Mp >= 512:
        tm_eff = _round_up(_cdiv(Mp, 2), sub)
    nm = _cdiv(Mp, tm_eff)                       # ragged edge block masked by Pallas

    ti_eff = min(ti, Ip)
    assert Ip % ti_eff == 0, "prepare_params must pad I to a multiple of ti"
    nk = Ip // ti_eff

    # Activations: pad only to the sublane multiple / lane-dense H (no full
    # tm-granularity M padding; usually a no-op).
    x2d = jnp.pad(x.reshape(M, H), ((0, Mp - M), (0, Hp - H)))

    # VMEM footprint: double-buffered x/out tiles and weight slices, one f32
    # accumulator, one live f32 (tm, ti) intermediate, plus Mosaic margin.
    vmem_needed = (
        2 * 2 * tm_eff * Hp * xdt                       # x + out tiles (double-buffered)
        + 2 * (Hp * ti_eff + ti_eff * Hp + ti_eff + Hp) * wdt  # W1/W2/b1/b2 slices (x2)
        + tm_eff * Hp * 4                               # f32 accumulator scratch
        + tm_eff * ti_eff * 4                           # live f32 intermediate
        + 4 * 2**20                                     # Mosaic internal scratch
    )
    vmem_limit = int(min(max(int(vmem_needed * 1.25), 32 * 2**20),
                         int(vmem_cap * 0.9)))

    cost = pl.CostEstimate(
        flops=4 * Mp * Hp * Ip,            # two matmuls: 2*M*H*I each
        transcendentals=Mp * Ip,           # tanh per intermediate element
        bytes_accessed=(
            x2d.size * xdt
            + nm * (w1p.size + w2p.size + b1p.size + b2p.size) * wdt
            + Mp * Hp * xdt
        ),
    )

    out2d = pl.pallas_call(
        _mlp_kernel,
        out_shape=jax.ShapeDtypeStruct((Mp, Hp), x.dtype),
        grid_spec=pltpu.PrefetchScalarGridSpec(
            num_scalar_prefetch=0,
            grid=(nm, nk),
            in_specs=[
                pl.BlockSpec((tm_eff, Hp), lambda i, k: (i, 0)),   # x row tile (constant over k)
                pl.BlockSpec((Hp, ti_eff), lambda i, k: (0, k)),   # W1 I-slice (streamed)
                pl.BlockSpec((1, ti_eff), lambda i, k: (0, k)),    # b1 I-slice
                pl.BlockSpec((ti_eff, Hp), lambda i, k: (k, 0)),   # W2 I-slice (streamed)
                pl.BlockSpec((1, Hp), lambda i, k: (0, 0)),        # b2
            ],
            out_specs=pl.BlockSpec((tm_eff, Hp), lambda i, k: (i, 0)),
            scratch_shapes=[pltpu.VMEM((tm_eff, Hp), jnp.float32)],
        ),
        compiler_params=pltpu.CompilerParams(
            dimension_semantics=("parallel", "arbitrary"),
            vmem_limit_bytes=vmem_limit,
        ),
        cost_estimate=cost,
    )(x2d, w1p, b1p, w2p, b2p)

    return out2d[:M, :H].reshape(B, N, H)


def decoder_mlp(x, w1, b1, w2, b2, *, tm=256, ti=512):
    """x: [B, N, H]; w1: [H, I]; b1: [I]; w2: [I, H]; b2: [H] -> [B, N, H].

    For production use, call prepare_params(...) once at load time and feed the
    padded params straight to _decoder_mlp_impl to avoid per-call weight pads.
    Returns an async result (no host sync here).
    """
    vmem_cap = _vmem_capacity_bytes()
    try:
        w1p, b1p, w2p, b2p, ti_eff = prepare_params(w1, b1, w2, b2, ti=ti)
        return _decoder_mlp_impl(x, w1p, b1p, w2p, b2p,
                                 tm=tm, ti=ti_eff, vmem_cap=vmem_cap)
    except Exception:
        # VMEM-reducing fallback: halve both tiles (never increases footprint).
        tm2, ti2 = max(64, tm // 2), max(128, ti // 2)
        w1p, b1p, w2p, b2p, ti_eff = prepare_params(w1, b1, w2, b2, ti=ti2)
        return _decoder_mlp_impl(x, w1p, b1p, w2p, b2p,
                                 tm=tm2, ti=ti_eff, vmem_cap=vmem_cap)


def _reference(x, w1, b1, w2, b2):
    h = jnp.einsum("bnh,hi->bni", x, w1, precision="highest") + b1
    h = _gelu_tanh(h)
    return jnp.einsum("bni,ih->bnh", h, w2, precision="highest") + b2


if __name__ == "__main__":
    # Small config consistent with the module: hidden_size=32, intermediate_size=64.
    B, N, H, I = 2, 8, 32, 64

    key = jax.random.PRNGKey(0)
    kx, k1, k2, k3, k4 = jax.random.split(key, 5)

    x = jax.random.normal(kx, (B, N, H), dtype=jnp.float32)
    # Deterministic parameter init (weights stored as [in, out] = PyTorch W.T).
    w1 = jax.random.normal(k1, (H, I), dtype=jnp.float32) * 0.02
    b1 = jax.random.normal(k2, (I,), dtype=jnp.float32) * 0.02
    w2 = jax.random.normal(k3, (I, H), dtype=jnp.float32) * 0.02
    b2 = jax.random.normal(k4, (H,), dtype=jnp.float32) * 0.02

    out = decoder_mlp(x, w1, b1, w2, b2)
    out = jax.block_until_ready(out)

    ref = _reference(x, w1, b1, w2, b2)
    assert out.shape == (B, N, H)
    assert jnp.allclose(out, ref, atol=1e-5, rtol=1e-5), "mismatch vs reference"

    print("KERNEL_OK")
</pallas_src>

<mosaic_0001>
module attributes {stable_mosaic.version = 11 : i64} {
  func.func @_mlp_kernel(%arg0: i32, %arg1: i32, %arg2: memref<16x128xf32, #tpu.memory_space<vmem>>, %arg3: memref<128x128xf32, #tpu.memory_space<vmem>>, %arg4: memref<1x128xf32, #tpu.memory_space<vmem>>, %arg5: memref<128x128xf32, #tpu.memory_space<vmem>>, %arg6: memref<1x128xf32, #tpu.memory_space<vmem>>, %arg7: memref<16x128xf32, #tpu.memory_space<vmem>>, %arg8: memref<16x128xf32, #tpu.memory_space<vmem>>) attributes {dimension_semantics = [#tpu.dimension_semantics<parallel>, #tpu.dimension_semantics<arbitrary>], iteration_bounds = array<i64: 1, 1>, scalar_prefetch = 0 : i64, scratch_operands = 1 : i64, tpu.core_type = #tpu.core_type<tc>, window_params = [{transform_indices = @transform_0, window_bounds = array<i64: 16, 128>}, {transform_indices = @transform_1, window_bounds = array<i64: 128, 128>}, {transform_indices = @transform_2, window_bounds = array<i64: 1, 128>}, {transform_indices = @transform_3, window_bounds = array<i64: 128, 128>}, {pipeline_mode = #tpu.pipeline_mode<synchronous>, transform_indices = @transform_4, window_bounds = array<i64: 1, 128>}, {transform_indices = @transform_5, window_bounds = array<i64: 16, 128>}]} {
    %c0 = arith.constant 0 : index
    %c0_0 = arith.constant 0 : index
    %0 = vector.load %arg2[%c0, %c0_0] : memref<16x128xf32, #tpu.memory_space<vmem>>, vector<16x128xf32>
    %c0_1 = arith.constant 0 : index
    %c0_2 = arith.constant 0 : index
    %1 = vector.load %arg3[%c0_1, %c0_2] : memref<128x128xf32, #tpu.memory_space<vmem>>, vector<128x128xf32>
    %cst = arith.constant dense<0.000000e+00> : vector<16x128xf32>
    %2 = tpu.matmul %0, %1, %cst {dimension_numbers = #tpu.dot_dimension_numbers<[1], [0], [0], [1], [0, 0, 1, 1], [], []>} : vector<16x128xf32>, vector<128x128xf32>, vector<16x128xf32> -> vector<16x128xf32>
    %c0_3 = arith.constant 0 : index
    %c0_4 = arith.constant 0 : index
    %3 = vector.load %arg4[%c0_3, %c0_4] : memref<1x128xf32, #tpu.memory_space<vmem>>, vector<1x128xf32>
    %4 = vector.broadcast %3 : vector<1x128xf32> to vector<16x128xf32>
    %5 = arith.addf %2, %4 : vector<16x128xf32>
    %cst_5 = arith.constant 5.000000e-01 : f32
    %6 = vector.broadcast %cst_5 : f32 to vector<16x128xf32>
    %7 = arith.mulf %6, %5 : vector<16x128xf32>
    %cst_6 = arith.constant 4.471500e-02 : f32
    %8 = vector.broadcast %cst_6 : f32 to vector<16x128xf32>
    %9 = arith.mulf %8, %5 : vector<16x128xf32>
    %10 = arith.mulf %9, %5 : vector<16x128xf32>
    %11 = arith.mulf %10, %5 : vector<16x128xf32>
    %12 = arith.addf %5, %11 : vector<16x128xf32>
    %cst_7 = arith.constant 0.797884583 : f32
    %13 = vector.broadcast %cst_7 : f32 to vector<16x128xf32>
    %14 = arith.mulf %13, %12 : vector<16x128xf32>
    %15 = math.tanh %14 : vector<16x128xf32>
    %cst_8 = arith.constant 1.000000e+00 : f32
    %16 = vector.broadcast %cst_8 : f32 to vector<16x128xf32>
    %17 = arith.addf %16, %15 : vector<16x128xf32>
    %18 = arith.mulf %7, %17 : vector<16x128xf32>
    %c0_9 = arith.constant 0 : index
    %c0_10 = arith.constant 0 : index
    %19 = vector.load %arg5[%c0_9, %c0_10] : memref<128x128xf32, #tpu.memory_space<vmem>>, vector<128x128xf32>
    %cst_11 = arith.constant dense<0.000000e+00> : vector<16x128xf32>
    %20 = tpu.matmul %18, %19, %cst_11 {dimension_numbers = #tpu.dot_dimension_numbers<[1], [0], [0], [1], [0, 0, 1, 1], [], []>} : vector<16x128xf32>, vector<128x128xf32>, vector<16x128xf32> -> vector<16x128xf32>
    %c0_i32 = arith.constant 0 : i32
    %21 = arith.cmpi eq, %arg1, %c0_i32 : i32
    %22 = arith.extui %21 : i1 to i32
    %c0_i32_12 = arith.constant 0 : i32
    %23 = arith.cmpi ne, %22, %c0_i32_12 : i32
    scf.if %23 {
      %c0_17 = arith.constant 0 : index
      %c0_18 = arith.constant 0 : index
      %30 = vector.load %arg8[%c0_17, %c0_18] : memref<16x128xf32, #tpu.memory_space<vmem>>, vector<16x128xf32>
      tpu.vector_store %arg8[%c0_17, %c0_18], %20 {strides = array<i32>} : memref<16x128xf32, #tpu.memory_space<vmem>>, vector<16x128xf32>,
    } else {
    }
    %c0_i32_13 = arith.constant 0 : i32
    %24 = arith.cmpi ne, %arg1, %c0_i32_13 : i32
    %25 = arith.extui %24 : i1 to i32
    %c0_i32_14 = arith.constant 0 : i32
    %26 = arith.cmpi ne, %25, %c0_i32_14 : i32
    scf.if %26 {
      %c0_17 = arith.constant 0 : index
      %c0_18 = arith.constant 0 : index
      %30 = vector.load %arg8[%c0_17, %c0_18] : memref<16x128xf32, #tpu.memory_space<vmem>>, vector<16x128xf32>
      %31 = arith.addf %30, %20 : vector<16x128xf32>
      %c0_19 = arith.constant 0 : index
      %c0_20 = arith.constant 0 : index
      %32 = vector.load %arg8[%c0_19, %c0_20] : memref<16x128xf32, #tpu.memory_space<vmem>>, vector<16x128xf32>
      tpu.vector_store %arg8[%c0_19, %c0_20], %31 {strides = array<i32>} : memref<16x128xf32, #tpu.memory_space<vmem>>, vector<16x128xf32>,
    } else {
    }
    %c0_i32_15 = arith.constant 0 : i32
    %27 = arith.cmpi eq, %arg1, %c0_i32_15 : i32
    %28 = arith.extui %27 : i1 to i32
    %c0_i32_16 = arith.constant 0 : i32
    %29 = arith.cmpi ne, %28, %c0_i32_16 : i32
    scf.if %29 {
      %c0_17 = arith.constant 0 : index
      %c0_18 = arith.constant 0 : index
      %30 = vector.load %arg8[%c0_17, %c0_18] : memref<16x128xf32, #tpu.memory_space<vmem>>, vector<16x128xf32>
      %c0_19 = arith.constant 0 : index
      %c0_20 = arith.constant 0 : index
      %31 = vector.load %arg6[%c0_19, %c0_20] : memref<1x128xf32, #tpu.memory_space<vmem>>, vector<1x128xf32>
      %32 = vector.broadcast %31 : vector<1x128xf32> to vector<16x128xf32>
      %33 = arith.addf %30, %32 : vector<16x128xf32>
      %c0_21 = arith.constant 0 : index
      %c0_22 = arith.constant 0 : index
      %34 = vector.load %arg7[%c0_21, %c0_22] : memref<16x128xf32, #tpu.memory_space<vmem>>, vector<16x128xf32>
      tpu.vector_store %arg7[%c0_21, %c0_22], %33 {strides = array<i32>} : memref<16x128xf32, #tpu.memory_space<vmem>>, vector<16x128xf32>,
    } else {
    }
    return
  }
  func.func @transform_0(%arg0: i32, %arg1: i32) -> (i32, i32) {
    %c0_i32 = arith.constant 0 : i32
    %c0_i32_0 = arith.constant 0 : i32
    return %arg0, %c0_i32 : i32, i32
  }
  func.func @transform_1(%arg0: i32, %arg1: i32) -> (i32, i32) {
    %c0_i32 = arith.constant 0 : i32
    %c0_i32_0 = arith.constant 0 : i32
    return %c0_i32, %arg1 : i32, i32
  }
  func.func @transform_2(%arg0: i32, %arg1: i32) -> (i32, i32) {
    %c0_i32 = arith.constant 0 : i32
    %c0_i32_0 = arith.constant 0 : i32
    return %c0_i32, %arg1 : i32, i32
  }
  func.func @transform_3(%arg0: i32, %arg1: i32) -> (i32, i32) {
    %c0_i32 = arith.constant 0 : i32
    %c0_i32_0 = arith.constant 0 : i32
    return %arg1, %c0_i32 : i32, i32
  }
  func.func @transform_4(%arg0: i32, %arg1: i32) -> (i32, i32) {
    %c0_i32 = arith.constant 0 : i32
    %c0_i32_0 = arith.constant 0 : i32
    %c0_i32_1 = arith.constant 0 : i32
    return %c0_i32, %c0_i32_0 : i32, i32
  }
  func.func @transform_5(%arg0: i32, %arg1: i32) -> (i32, i32) {
    %c0_i32 = arith.constant 0 : i32
    %c0_i32_0 = arith.constant 0 : i32
    return %arg0, %c0_i32 : i32, i32
  }
}

module attributes {stable_mosaic.version = 11 : i64} {
  func.func @_mlp_kernel(%arg0: i32, %arg1: i32, %arg2: memref<16x128xf32, #tpu.memory_space<vmem>>, %arg3: memref<128x128xf32, #tpu.memory_space<vmem>>, %arg4: memref<1x128xf32, #tpu.memory_space<vmem>>, %arg5: memref<128x128xf32, #tpu.memory_space<vmem>>, %arg6: memref<1x128xf32, #tpu.memory_space<vmem>>, %arg7: memref<16x128xf32, #tpu.memory_space<vmem>>, %arg8: memref<16x128xf32, #tpu.memory_space<vmem>>) attributes {dimension_semantics = [#tpu.dimension_semantics<parallel>, #tpu.dimension_semantics<arbitrary>], iteration_bounds = array<i64: 1, 1>, scalar_prefetch = 0 : i64, scratch_operands = 1 : i64, tpu.core_type = #tpu.core_type<tc>, window_params = [{transform_indices = @transform_0, window_bounds = array<i64: 16, 128>}, {transform_indices = @transform_1, window_bounds = array<i64: 128, 128>}, {transform_indices = @transform_2, window_bounds = array<i64: 1, 128>}, {transform_indices = @transform_3, window_bounds = array<i64: 128, 128>}, {pipeline_mode = #tpu.pipeline_mode<synchronous>, transform_indices = @transform_4, window_bounds = array<i64: 1, 128>}, {transform_indices = @transform_5, window_bounds = array<i64: 16, 128>}]} {
    %c0 = arith.constant 0 : index
    %c0_0 = arith.constant 0 : index
    %0 = vector.load %arg2[%c0, %c0_0] : memref<16x128xf32, #tpu.memory_space<vmem>>, vector<16x128xf32>
    %c0_1 = arith.constant 0 : index
    %c0_2 = arith.constant 0 : index
    %1 = vector.load %arg3[%c0_1, %c0_2] : memref<128x128xf32, #tpu.memory_space<vmem>>, vector<128x128xf32>
    %cst = arith.constant dense<0.000000e+00> : vector<16x128xf32>
    %2 = tpu.matmul %0, %1, %cst {dimension_numbers = #tpu.dot_dimension_numbers<[1], [0], [0], [1], [0, 0, 1, 1], [], []>} : vector<16x128xf32>, vector<128x128xf32>, vector<16x128xf32> -> vector<16x128xf32>
    %c0_3 = arith.constant 0 : index
    %c0_4 = arith.constant 0 : index
    %3 = vector.load %arg4[%c0_3, %c0_4] : memref<1x128xf32, #tpu.memory_space<vmem>>, vector<1x128xf32>
    %4 = vector.broadcast %3 : vector<1x128xf32> to vector<16x128xf32>
    %5 = arith.addf %2, %4 : vector<16x128xf32>
    %cst_5 = arith.constant 5.000000e-01 : f32
    %6 = vector.broadcast %cst_5 : f32 to vector<16x128xf32>
    %7 = arith.mulf %6, %5 : vector<16x128xf32>
    %cst_6 = arith.constant 4.471500e-02 : f32
    %8 = vector.broadcast %cst_6 : f32 to vector<16x128xf32>
    %9 = arith.mulf %8, %5 : vector<16x128xf32>
    %10 = arith.mulf %9, %5 : vector<16x128xf32>
    %11 = arith.mulf %10, %5 : vector<16x128xf32>
    %12 = arith.addf %5, %11 : vector<16x128xf32>
    %cst_7 = arith.constant 0.797884583 : f32
    %13 = vector.broadcast %cst_7 : f32 to vector<16x128xf32>
    %14 = arith.mulf %13, %12 : vector<16x128xf32>
    %15 = math.tanh %14 : vector<16x128xf32>
    %cst_8 = arith.constant 1.000000e+00 : f32
    %16 = vector.broadcast %cst_8 : f32 to vector<16x128xf32>
    %17 = arith.addf %16, %15 : vector<16x128xf32>
    %18 = arith.mulf %7, %17 : vector<16x128xf32>
    %c0_9 = arith.constant 0 : index
    %c0_10 = arith.constant 0 : index
    %19 = vector.load %arg5[%c0_9, %c0_10] : memref<128x128xf32, #tpu.memory_space<vmem>>, vector<128x128xf32>
    %cst_11 = arith.constant dense<0.000000e+00> : vector<16x128xf32>
    %20 = tpu.matmul %18, %19, %cst_11 {dimension_numbers = #tpu.dot_dimension_numbers<[1], [0], [0], [1], [0, 0, 1, 1], [], []>} : vector<16x128xf32>, vector<128x128xf32>, vector<16x128xf32> -> vector<16x128xf32>
    %c0_i32 = arith.constant 0 : i32
    %21 = arith.cmpi eq, %arg1, %c0_i32 : i32
    %22 = arith.extui %21 : i1 to i32
    %c0_i32_12 = arith.constant 0 : i32
    %23 = arith.cmpi ne, %22, %c0_i32_12 : i32
    scf.if %23 {
      %c0_17 = arith.constant 0 : index
      %c0_18 = arith.constant 0 : index
      %30 = vector.load %arg8[%c0_17, %c0_18] : memref<16x128xf32, #tpu.memory_space<vmem>>, vector<16x128xf32>
      tpu.vector_store %arg8[%c0_17, %c0_18], %20 {strides = array<i32>} : memref<16x128xf32, #tpu.memory_space<vmem>>, vector<16x128xf32>,
    } else {
    }
    %c0_i32_13 = arith.constant 0 : i32
    %24 = arith.cmpi ne, %arg1, %c0_i32_13 : i32
    %25 = arith.extui %24 : i1 to i32
    %c0_i32_14 = arith.constant 0 : i32
    %26 = arith.cmpi ne, %25, %c0_i32_14 : i32
    scf.if %26 {
      %c0_17 = arith.constant 0 : index
      %c0_18 = arith.constant 0 : index
      %30 = vector.load %arg8[%c0_17, %c0_18] : memref<16x128xf32, #tpu.memory_space<vmem>>, vector<16x128xf32>
      %31 = arith.addf %30, %20 : vector<16x128xf32>
      %c0_19 = arith.constant 0 : index
      %c0_20 = arith.constant 0 : index
      %32 = vector.load %arg8[%c0_19, %c0_20] : memref<16x128xf32, #tpu.memory_space<vmem>>, vector<16x128xf32>
      tpu.vector_store %arg8[%c0_19, %c0_20], %31 {strides = array<i32>} : memref<16x128xf32, #tpu.memory_space<vmem>>, vector<16x128xf32>,
    } else {
    }
    %c0_i32_15 = arith.constant 0 : i32
    %27 = arith.cmpi eq, %arg1, %c0_i32_15 : i32
    %28 = arith.extui %27 : i1 to i32
    %c0_i32_16 = arith.constant 0 : i32
    %29 = arith.cmpi ne, %28, %c0_i32_16 : i32
    scf.if %29 {
      %c0_17 = arith.constant 0 : index
      %c0_18 = arith.constant 0 : index
      %30 = vector.load %arg8[%c0_17, %c0_18] : memref<16x128xf32, #tpu.memory_space<vmem>>, vector<16x128xf32>
      %c0_19 = arith.constant 0 : index
      %c0_20 = arith.constant 0 : index
      %31 = vector.load %arg6[%c0_19, %c0_20] : memref<1x128xf32, #tpu.memory_space<vmem>>, vector<1x128xf32>
      %32 = vector.broadcast %31 : vector<1x128xf32> to vector<16x128xf32>
      %33 = arith.addf %30, %32 : vector<16x128xf32>
      %c0_21 = arith.constant 0 : index
      %c0_22 = arith.constant 0 : index
      %34 = vector.load %arg7[%c0_21, %c0_22] : memref<16x128xf32, #tpu.memory_space<vmem>>, vector<16x128xf32>
      tpu.vector_store %arg7[%c0_21, %c0_22], %33 {strides = array<i32>} : memref<16x128xf32, #tpu.memory_space<vmem>>, vector<16x128xf32>,
    } else {
    }
    return
  }
  func.func @transform_0(%arg0: i32, %arg1: i32) -> (i32, i32) {
    %c0_i32 = arith.constant 0 : i32
    %c0_i32_0 = arith.constant 0 : i32
    return %arg0, %c0_i32 : i32, i32
  }
  func.func @transform_1(%arg0: i32, %arg1: i32) -> (i32, i32) {
    %c0_i32 = arith.constant 0 : i32
    %c0_i32_0 = arith.constant 0 : i32
    return %c0_i32, %arg1 : i32, i32
  }
  func.func @transform_2(%arg0: i32, %arg1: i32) -> (i32, i32) {
    %c0_i32 = arith.constant 0 : i32
    %c0_i32_0 = arith.constant 0 : i32
    return %c0_i32, %arg1 : i32, i32
  }
  func.func @transform_3(%arg0: i32, %arg1: i32) -> (i32, i32) {
    %c0_i32 = arith.constant 0 : i32
    %c0_i32_0 = arith.constant 0 : i32
    return %arg1, %c0_i32 : i32, i32
  }
  func.func @transform_4(%arg0: i32, %arg1: i32) -> (i32, i32) {
    %c0_i32 = arith.constant 0 : i32
    %c0_i32_0 = arith.constant 0 : i32
    %c0_i32_1 = arith.constant 0 : i32
    return %c0_i32, %c0_i32_0 : i32, i32
  }
  func.func @transform_5(%arg0: i32, %arg1: i32) -> (i32, i32) {
    %c0_i32 = arith.constant 0 : i32
    %c0_i32_0 = arith.constant 0 : i32
    return %arg0, %c0_i32 : i32, i32
  }
}

</mosaic_0001>

<llo_original>
// kernel: _decoder_mlp_impl.1
$region0: #{_decoder_mlp_impl.1}
  #allocation0 [shape = 'u32[]', space=smem, size = 0x4, offset = 0x4, fixed_abs, tag = 'smem constant byte address 0x4 - core index']
  #allocation1 [shape = 'u32[144,128]{1,0:T(1,128)}', space=vmem, size = 0x12000, scoped, tag = 'internal scratch']
  #allocation2 [shape = 'f32[16,128]{1,0:T(8,128)}', space=vmem, size = 0x2000, scoped, tag = 'scratch operand']
  %s0 = inlined_call_operand.vmem [shape: f32[16,128], index: 0, kind: input, shape index: {}]
  %s1 = inlined_call_operand.hbm [shape: f32[128,128], index: 1, kind: input, shape index: {}]
  %s2 = inlined_call_operand.vmem [shape: f32[1,128], index: 2, kind: input, shape index: {}]
  %s3 = inlined_call_operand.hbm [shape: f32[128,128], index: 3, kind: input, shape index: {}]
  %s4 = inlined_call_operand.vmem [shape: f32[1,128], index: 4, kind: input, shape index: {}]
  %s5 = inlined_call_operand.vmem [shape: f32[16,128], index: 5, kind: output, shape index: {}]
  %s6 = sld [smem:[#allocation0]]
  $region50: #{_decoder_mlp_impl.1} parent=0
    _
  %s8 = ssub.s32 1, %s6
  %s9 = scalar_select 0, %s8, %s6
  $region1: #{_decoder_mlp_impl.1} parent=0
    #allocation3 [shape = 'u8[65536]{0}', space=vmem, size = 0x10000, scoped, tag = 'input window, operand 1, single buffered']
    #allocation4 [shape = 's32[1]{0}', space=sflag, size = 0x4, scoped, tag = 'scoped memory for _decoder_mlp_impl.1']
    #allocation5 [shape = 'u8[65536]{0}', space=vmem, size = 0x10000, scoped, tag = 'input window, operand 3, single buffered']
    #allocation6 [shape = 's32[1]{0}', space=sflag, size = 0x4, scoped, tag = 'scoped memory for _decoder_mlp_impl.1']
    %10 = vsyncpa [#allocation4], 0
    %11 = vsyncpa [#allocation6], 0
    // Predicated region
    $region2: #{_decoder_mlp_impl.1} parent=1 // pred_check
      _
    $region3: #{_decoder_mlp_impl.1} parent=1 // pred_check_branch
      %13 = sbr.rel (0) target = $region5
    $region4: #{_decoder_mlp_impl.1} parent=1 // pred_region
      _
    $region5: #{_decoder_mlp_impl.1} parent=1 // pred_fallthru
      _
    // Predicated region
    $region6: #{_decoder_mlp_impl.1} parent=1 // pred_check
      _
    $region7: #{_decoder_mlp_impl.1} parent=1 // pred_check_branch
      %15 = sbr.rel (0) target = $region9
    $region8: #{_decoder_mlp_impl.1} parent=1 // pred_region
      %s17 = ssub.s32 2048, 2048
      %18 = vsyncadd [#allocation4], %s17
      %s19 = sshll.u32 [#allocation3], 4
      %s20 = int_to_ptr.vmem [resolvable:$true] %s19
      %25 = dma.hbm_to_vmem [thread:$0]  %s1, 2048, %s20, [#allocation4], 128, 128, 8
    $region9: #{_decoder_mlp_impl.1} parent=1 // pred_fallthru
      _
    // Predicated region
    $region10: #{_decoder_mlp_impl.1} parent=1 // pred_check
      _
    $region11: #{_decoder_mlp_impl.1} parent=1 // pred_check_branch
      %27 = sbr.rel (0) target = $region13
    $region12: #{_decoder_mlp_impl.1} parent=1 // pred_region
      _
    $region13: #{_decoder_mlp_impl.1} parent=1 // pred_fallthru
      _
    // Predicated region
    $region14: #{_decoder_mlp_impl.1} parent=1 // pred_check
      _
    $region15: #{_decoder_mlp_impl.1} parent=1 // pred_check_branch
      %29 = sbr.rel (0) target = $region17
    $region16: #{_decoder_mlp_impl.1} parent=1 // pred_region
      %s31 = ssub.s32 2048, 2048
      %32 = vsyncadd [#allocation6], %s31
      %s33 = sshll.u32 [#allocation5], 4
      %s34 = int_to_ptr.vmem [resolvable:$true] %s33
      %39 = dma.hbm_to_vmem [thread:$0]  %s3, 2048, %s34, [#allocation6], 128, 128, 8
    $region17: #{_decoder_mlp_impl.1} parent=1 // pred_fallthru
      _
    // Predicated region
    $region18: #{_decoder_mlp_impl.1} parent=1 // pred_check
      _
    $region19: #{_decoder_mlp_impl.1} parent=1 // pred_check_branch
      %41 = sbr.rel (0) target = $region21
    $region20: #{_decoder_mlp_impl.1} parent=1 // pred_region
      _
    $region21: #{_decoder_mlp_impl.1} parent=1 // pred_fallthru
      _
    // Predicated region
    $region22: #{_decoder_mlp_impl.1} parent=1 // pred_check
      _
    $region23: #{_decoder_mlp_impl.1} parent=1 // pred_check_branch
      %43 = sbr.rel (0) target = $region25
    $region24: #{_decoder_mlp_impl.1} parent=1 // pred_region
      %44 = dma.done [#allocation4], 2048
    $region25: #{_decoder_mlp_impl.1} parent=1 // pred_fallthru
      _
    // Predicated region
    $region26: #{_decoder_mlp_impl.1} parent=1 // pred_check
      _
    $region27: #{_decoder_mlp_impl.1} parent=1 // pred_check_branch
      %46 = sbr.rel (0) target = $region29
    $region28: #{_decoder_mlp_impl.1} parent=1 // pred_region
      %47 = dma.done [#allocation6], 2048
    $region29: #{_decoder_mlp_impl.1} parent=1 // pred_fallthru
      _
    %v48 = vld [vmem:[%s0] sm:$0xff]
    %v49 = vld [vmem:[%s0 + $0x8] sm:$0xff]
    %v50 = vld [vmem:[#allocation3] sm:$0xff]
    %v51 = vld [vmem:[#allocation3 + $0x8] sm:$0xff]
    %v52 = vld [vmem:[#allocation3 + $0x10] sm:$0xff]
    %v53 = vld [vmem:[#allocation3 + $0x18] sm:$0xff]
    %v54 = vld [vmem:[#allocation3 + $0x20] sm:$0xff]
    %v55 = vld [vmem:[#allocation3 + $0x28] sm:$0xff]
    %v56 = vld [vmem:[#allocation3 + $0x30] sm:$0xff]
    %v57 = vld [vmem:[#allocation3 + $0x38] sm:$0xff]
    %v58 = vld [vmem:[#allocation3 + $0x40] sm:$0xff]
    %v59 = vld [vmem:[#allocation3 + $0x48] sm:$0xff]
    %v60 = vld [vmem:[#allocation3 + $0x50] sm:$0xff]
    %v61 = vld [vmem:[#allocation3 + $0x58] sm:$0xff]
    %v62 = vld [vmem:[#allocation3 + $0x60] sm:$0xff]
    %v63 = vld [vmem:[#allocation3 + $0x68] sm:$0xff]
    %v64 = vld [vmem:[#allocation3 + $0x70] sm:$0xff]
    %v65 = vld [vmem:[#allocation3 + $0x78] sm:$0xff]
    %v66 = vld [vmem:[%s2] sm:$0x1]
    %v68 = vlaneseq
    %v69 = vshrl.u32 %v68, 7
    %v70 = vsub.s32 0, %v69
    %v71 = vrot.slane %v66, %v70
    %73 = vmatprep.subr.mxu0 0.0
    %74 = vmatpush1.msra.mxu0 %v65
    %75 = vmatprep.subr.mxu0 0.0
    %76 = vmatpush1.msra.mxu0 %v64
    %77 = vmatprep.subr.mxu0 0.0
    %78 = vmatpush1.msra.mxu0 %v63
    %79 = vmatprep.subr.mxu0 0.0
    %80 = vmatpush1.msra.mxu0 %v62
    %81 = vmatprep.subr.mxu0 0.0
    %82 = vmatpush1.msra.mxu0 %v61
    %83 = vmatprep.subr.mxu0 0.0
    %84 = vmatpush1.msra.mxu0 %v60
    %85 = vmatprep.subr.mxu0 0.0
    %86 = vmatpush1.msra.mxu0 %v59
    %87 = vmatprep.subr.mxu0 0.0
    %88 = vmatpush1.msra.mxu0 %v58
    %89 = vmatprep.subr.mxu0 0.0
    %90 = vmatpush1.msra.mxu0 %v57
    %91 = vmatprep.subr.mxu0 0.0
    %92 = vmatpush1.msra.mxu0 %v56
    %93 = vmatprep.subr.mxu0 0.0
    %94 = vmatpush1.msra.mxu0 %v55
    %95 = vmatprep.subr.mxu0 0.0
    %96 = vmatpush1.msra.mxu0 %v54
    %97 = vmatprep.subr.mxu0 0.0
    %98 = vmatpush1.msra.mxu0 %v53
    %99 = vmatprep.subr.mxu0 0.0
    %100 = vmatpush1.msra.mxu0 %v52
    %101 = vmatprep.subr.mxu0 0.0
    %102 = vmatpush1.msra.mxu0 %v51
    %103 = vmatprep.subr.mxu0 0.0
    %104 = vmatpush1.msra.mxu0 %v50
    %105 = vmatprep.subr.mxu0 0.0
    %106 = vmatpush2.msra.mxu0 0.0
    %107 = vmatprep.subr.mxu0 0.0
    %108 = vmatpush2.msra.mxu0 0.0
    %109 = vmatprep.subr.mxu0 0.0
    %110 = vmatpush2.msra.mxu0 0.0
    %111 = vmatprep.subr.mxu0 0.0
    %112 = vmatpush2.msra.mxu0 0.0
    %113 = vmatprep.subr.mxu0 0.0
    %114 = vmatpush2.msra.mxu0 0.0
    %115 = vmatprep.subr.mxu0 0.0
    %116 = vmatpush2.msra.mxu0 0.0
    %117 = vmatprep.subr.mxu0 0.0
    %118 = vmatpush2.msra.mxu0 0.0
    %119 = vmatprep.subr.mxu0 0.0
    %120 = vmatpush2.msra.mxu0 0.0
    %121 = vmatprep.subr.mxu0 0.0
    %122 = vmatpush2.msra.mxu0 0.0
    %123 = vmatprep.subr.mxu0 0.0
    %124 = vmatpush2.msra.mxu0 0.0
    %125 = vmatprep.subr.mxu0 0.0
    %126 = vmatpush2.msra.mxu0 0.0
    %127 = vmatprep.subr.mxu0 0.0
    %128 = vmatpush2.msra.mxu0 0.0
    %129 = vmatprep.subr.mxu0 0.0
    %130 = vmatpush2.msra.mxu0 0.0
    %131 = vmatprep.subr.mxu0 0.0
    %132 = vmatpush2.msra.mxu0 0.0
    %133 = vmatprep.subr.mxu0 0.0
    %134 = vmatpush2.msra.mxu0 0.0
    %135 = vmatprep.subr.mxu0 0.0
    %136 = vmatpush2.msra.mxu0 0.0
    %137 = vmatprep.mubr.f32.mxu0 0.0
    %138 = vmatmul.mubr.f32.gmra.mxu0 %v48
    %v139 = vpop.f32.mrf.mxu0
    %v140 = vadd.f32 %v71, %v139
    %v141 = vpop.f32.mrf.mxu0
    %142 = vmatprep.mubr.f32.mxu0 0.0
    %143 = vmatmul.mubr.f32.gmra.mxu0 %v49
    %v144 = vpop.f32.mrf.mxu0
    %v145 = vadd.f32 %v71, %v144
    %v146 = vpop.f32.mrf.mxu0
    %147 = vdwg.mxu0
    %v148 = vmul.f32 %v140, 0.5
    %v149 = vmul.f32 %v145, 0.5
    %v150 = vmul.f32 %v140, 0.044715
    %v151 = vmul.f32 %v145, 0.044715
    %v152 = vmul.f32 %v150, %v140
    %v153 = vmul.f32 %v151, %v145
    %v154 = vmul.f32 %v152, %v140
    %v155 = vmul.f32 %v153, %v145
    %v156 = vadd.f32 %v140, %v154
    %v157 = vadd.f32 %v145, %v155
    %v158 = vmul.f32 %v156, 0.7978846
    %v159 = vmul.f32 %v157, 0.7978846
    %v160 = vtanh.pop %v158
    %v161 = vtanh.pop %v159
    %v162 = vadd.f32 %v160, 1.0
    %v163 = vadd.f32 %v161, 1.0
    %v164 = vmul.f32 %v148, %v162
    %v165 = vmul.f32 %v149, %v163
    %v166 = vld [vmem:[#allocation5] sm:$0xff]
    %v167 = vld [vmem:[#allocation5 + $0x8] sm:$0xff]
    %v168 = vld [vmem:[#allocation5 + $0x10] sm:$0xff]
    %v169 = vld [vmem:[#allocation5 + $0x18] sm:$0xff]
    %v170 = vld [vmem:[#allocation5 + $0x20] sm:$0xff]
    %v171 = vld [vmem:[#allocation5 + $0x28] sm:$0xff]
    %v172 = vld [vmem:[#allocation5 + $0x30] sm:$0xff]
    %v173 = vld [vmem:[#allocation5 + $0x38] sm:$0xff]
    %v174 = vld [vmem:[#allocation5 + $0x40] sm:$0xff]
    %v175 = vld [vmem:[#allocation5 + $0x48] sm:$0xff]
    %v176 = vld [vmem:[#allocation5 + $0x50] sm:$0xff]
    %v177 = vld [vmem:[#allocation5 + $0x58] sm:$0xff]
    %v178 = vld [vmem:[#allocation5 + $0x60] sm:$0xff]
    %v179 = vld [vmem:[#allocation5 + $0x68] sm:$0xff]
    %v180 = vld [vmem:[#allocation5 + $0x70] sm:$0xff]
    %v181 = vld [vmem:[#allocation5 + $0x78] sm:$0xff]
    %182 = vmatprep.subr.mxu0 0.0
    %183 = vmatpush1.msra.mxu0 %v181
    %184 = vmatprep.subr.mxu0 0.0
    %185 = vmatpush1.msra.mxu0 %v180
    %186 = vmatprep.subr.mxu0 0.0
    %187 = vmatpush1.msra.mxu0 %v179
    %188 = vmatprep.subr.mxu0 0.0
    %189 = vmatpush1.msra.mxu0 %v178
    %190 = vmatprep.subr.mxu0 0.0
    %191 = vmatpush1.msra.mxu0 %v177
    %192 = vmatprep.subr.mxu0 0.0
    %193 = vmatpush1.msra.mxu0 %v176
    %194 = vmatprep.subr.mxu0 0.0
    %195 = vmatpush1.msra.mxu0 %v175
    %196 = vmatprep.subr.mxu0 0.0
    %197 = vmatpush1.msra.mxu0 %v174
    %198 = vmatprep.subr.mxu0 0.0
    %199 = vmatpush1.msra.mxu0 %v173
    %200 = vmatprep.subr.mxu0 0.0
    %201 = vmatpush1.msra.mxu0 %v172
    %202 = vmatprep.subr.mxu0 0.0
    %203 = vmatpush1.msra.mxu0 %v171
    %204 = vmatprep.subr.mxu0 0.0
    %205 = vmatpush1.msra.mxu0 %v170
    %206 = vmatprep.subr.mxu0 0.0
    %207 = vmatpush1.msra.mxu0 %v169
    %208 = vmatprep.subr.mxu0 0.0
    %209 = vmatpush1.msra.mxu0 %v168
    %210 = vmatprep.subr.mxu0 0.0
    %211 = vmatpush1.msra.mxu0 %v167
    %212 = vmatprep.subr.mxu0 0.0
    %213 = vmatpush1.msra.mxu0 %v166
    %214 = vmatprep.subr.mxu0 0.0
    %215 = vmatpush2.msra.mxu0 0.0
    %216 = vmatprep.subr.mxu0 0.0
    %217 = vmatpush2.msra.mxu0 0.0
    %218 = vmatprep.subr.mxu0 0.0
    %219 = vmatpush2.msra.mxu0 0.0
    %220 = vmatprep.subr.mxu0 0.0
    %221 = vmatpush2.msra.mxu0 0.0
    %222 = vmatprep.subr.mxu0 0.0
    %223 = vmatpush2.msra.mxu0 0.0
    %224 = vmatprep.subr.mxu0 0.0
    %225 = vmatpush2.msra.mxu0 0.0
    %226 = vmatprep.subr.mxu0 0.0
    %227 = vmatpush2.msra.mxu0 0.0
    %228 = vmatprep.subr.mxu0 0.0
    %229 = vmatpush2.msra.mxu0 0.0
    %230 = vmatprep.subr.mxu0 0.0
    %231 = vmatpush2.msra.mxu0 0.0
    %232 = vmatprep.subr.mxu0 0.0
    %233 = vmatpush2.msra.mxu0 0.0
    %234 = vmatprep.subr.mxu0 0.0
    %235 = vmatpush2.msra.mxu0 0.0
    %236 = vmatprep.subr.mxu0 0.0
    %237 = vmatpush2.msra.mxu0 0.0
    %238 = vmatprep.subr.mxu0 0.0
    %239 = vmatpush2.msra.mxu0 0.0
    %240 = vmatprep.subr.mxu0 0.0
    %241 = vmatpush2.msra.mxu0 0.0
    %242 = vmatprep.subr.mxu0 0.0
    %243 = vmatpush2.msra.mxu0 0.0
    %244 = vmatprep.subr.mxu0 0.0
    %245 = vmatpush2.msra.mxu0 0.0
    %246 = vmatprep.mubr.f32.mxu0 0.0
    %247 = vmatmul.mubr.f32.gmra.mxu0 %v164
    %v248 = vpop.f32.mrf.mxu0
    %v249 = vadd.f32 0.0, %v248
    %v250 = vpop.f32.mrf.mxu0
    %251 = vmatprep.mubr.f32.mxu0 0.0
    %252 = vmatmul.mubr.f32.gmra.mxu0 %v165
    %v253 = vpop.f32.mrf.mxu0
    %v254 = vadd.f32 0.0, %v253
    %v255 = vpop.f32.mrf.mxu0
    %256 = vdwg.mxu0
    %p257 = scmp.eq.s32.totalorder 0, 0
    // Predicated region
    $region30: #{_decoder_mlp_impl.1} parent=1 // pred_check
      %p258 = pneg %p257
    $region31: #{_decoder_mlp_impl.1} parent=1 // pred_check_branch
      %260 = sbr.rel (%p258) target = $region33
    $region32: #{_decoder_mlp_impl.1} parent=1 // pred_region
      %261 = vst [vmem:[#allocation2] sm:$0xff] %v249
      %262 = vst [vmem:[#allocation2 + $0x8] sm:$0xff] %v254
    $region33: #{_decoder_mlp_impl.1} parent=1 // pred_fallthru
      _
    %p263 = scmp.ne.s32.totalorder 0, 0
    // Predicated region
    $region34: #{_decoder_mlp_impl.1} parent=1 // pred_check
      %p264 = pneg %p263
    $region35: #{_decoder_mlp_impl.1} parent=1 // pred_check_branch
      %266 = sbr.rel (%p264) target = $region37
    $region36: #{_decoder_mlp_impl.1} parent=1 // pred_region
      %v267 = vld [vmem:[#allocation2] sm:$0xff]
      %v268 = vld [vmem:[#allocation2 + $0x8] sm:$0xff]
      %v269 = vadd.f32 %v267, %v249
      %v270 = vadd.f32 %v268, %v254
      %271 = vst [vmem:[#allocation2] sm:$0xff] %v269
      %272 = vst [vmem:[#allocation2 + $0x8] sm:$0xff] %v270
    $region37: #{_decoder_mlp_impl.1} parent=1 // pred_fallthru
      _
    // Predicated region
    $region38: #{_decoder_mlp_impl.1} parent=1 // pred_check
      %p273 = pneg %p257
    $region39: #{_decoder_mlp_impl.1} parent=1 // pred_check_branch
      %275 = sbr.rel (%p273) target = $region41
    $region40: #{_decoder_mlp_impl.1} parent=1 // pred_region
      %v276 = vld [vmem:[#allocation2] sm:$0xff]
      %v277 = vld [vmem:[#allocation2 + $0x8] sm:$0xff]
      %v278 = vld [vmem:[%s4] sm:$0x1]
      %v280 = vlaneseq
      %v281 = vshrl.u32 %v280, 7
      %v282 = vsub.s32 0, %v281
      %v283 = vrot.slane %v278, %v282
      %v285 = vadd.f32 %v276, %v283
      %v286 = vadd.f32 %v277, %v283
      %287 = vst [vmem:[%s5] sm:$0xff] %v285
      %288 = vst [vmem:[%s5 + $0x8] sm:$0xff] %v286
    $region41: #{_decoder_mlp_impl.1} parent=1 // pred_fallthru
      _
    // Predicated region
    $region42: #{_decoder_mlp_impl.1} parent=1 // pred_check
      _
    $region43: #{_decoder_mlp_impl.1} parent=1 // pred_check_branch
      %290 = sbr.rel (0) target = $region45
    $region44: #{_decoder_mlp_impl.1} parent=1 // pred_region
      _
    $region45: #{_decoder_mlp_impl.1} parent=1 // pred_fallthru
      _
    // Predicated region
    $region46: #{_decoder_mlp_impl.1} parent=1 // pred_check
      _
    $region47: #{_decoder_mlp_impl.1} parent=1 // pred_check_branch
      %292 = sbr.rel (0) target = $region49
    $region48: #{_decoder_mlp_impl.1} parent=1 // pred_region
      _
    $region49: #{_decoder_mlp_impl.1} parent=1 // pred_fallthru
      _
    %293 = vsyncpa [#allocation4], 1
    %294 = vsyncpa [#allocation6], 1

// kernel: _decoder_mlp_impl.1
$region0: #{_decoder_mlp_impl.1}
  #allocation0 [shape = 'u32[]', space=smem, size = 0x4, offset = 0x4, fixed_abs, tag = 'smem constant byte address 0x4 - core index']
  #allocation1 [shape = 'u32[144,128]{1,0:T(1,128)}', space=vmem, size = 0x12000, scoped, tag = 'internal scratch']
  #allocation2 [shape = 'f32[16,128]{1,0:T(8,128)}', space=vmem, size = 0x2000, scoped, tag = 'scratch operand']
  %s0 = inlined_call_operand.vmem [shape: f32[16,128], index: 0, kind: input, shape index: {}]
  %s1 = inlined_call_operand.hbm [shape: f32[128,128], index: 1, kind: input, shape index: {}]
  %s2 = inlined_call_operand.vmem [shape: f32[1,128], index: 2, kind: input, shape index: {}]
  %s3 = inlined_call_operand.hbm [shape: f32[128,128], index: 3, kind: input, shape index: {}]
  %s4 = inlined_call_operand.vmem [shape: f32[1,128], index: 4, kind: input, shape index: {}]
  %s5 = inlined_call_operand.vmem [shape: f32[16,128], index: 5, kind: output, shape index: {}]
  %s6 = sld [smem:[#allocation0]]
  $region50: #{_decoder_mlp_impl.1} parent=0
    _
  %s8 = ssub.s32 1, %s6
  %s9 = scalar_select 0, %s8, %s6
  $region1: #{_decoder_mlp_impl.1} parent=0
    #allocation3 [shape = 'u8[65536]{0}', space=vmem, size = 0x10000, scoped, tag = 'input window, operand 1, single buffered']
    #allocation4 [shape = 's32[1]{0}', space=sflag, size = 0x4, scoped, tag = 'scoped memory for _decoder_mlp_impl.1']
    #allocation5 [shape = 'u8[65536]{0}', space=vmem, size = 0x10000, scoped, tag = 'input window, operand 3, single buffered']
    #allocation6 [shape = 's32[1]{0}', space=sflag, size = 0x4, scoped, tag = 'scoped memory for _decoder_mlp_impl.1']
    %10 = vsyncpa [#allocation4], 0
    %11 = vsyncpa [#allocation6], 0
    // Predicated region
    $region2: #{_decoder_mlp_impl.1} parent=1 // pred_check
      _
    $region3: #{_decoder_mlp_impl.1} parent=1 // pred_check_branch
      %13 = sbr.rel (0) target = $region5
    $region4: #{_decoder_mlp_impl.1} parent=1 // pred_region
      _
    $region5: #{_decoder_mlp_impl.1} parent=1 // pred_fallthru
      _
    // Predicated region
    $region6: #{_decoder_mlp_impl.1} parent=1 // pred_check
      _
    $region7: #{_decoder_mlp_impl.1} parent=1 // pred_check_branch
      %15 = sbr.rel (0) target = $region9
    $region8: #{_decoder_mlp_impl.1} parent=1 // pred_region
      %s17 = ssub.s32 2048, 2048
      %18 = vsyncadd [#allocation4], %s17
      %s19 = sshll.u32 [#allocation3], 4
      %s20 = int_to_ptr.vmem [resolvable:$true] %s19
      %25 = dma.hbm_to_vmem [thread:$0]  %s1, 2048, %s20, [#allocation4], 128, 128, 8
    $region9: #{_decoder_mlp_impl.1} parent=1 // pred_fallthru
      _
    // Predicated region
    $region10: #{_decoder_mlp_impl.1} parent=1 // pred_check
      _
    $region11: #{_decoder_mlp_impl.1} parent=1 // pred_check_branch
      %27 = sbr.rel (0) target = $region13
    $region12: #{_decoder_mlp_impl.1} parent=1 // pred_region
      _
    $region13: #{_decoder_mlp_impl.1} parent=1 // pred_fallthru
      _
    // Predicated region
    $region14: #{_decoder_mlp_impl.1} parent=1 // pred_check
      _
    $region15: #{_decoder_mlp_impl.1} parent=1 // pred_check_branch
      %29 = sbr.rel (0) target = $region17
    $region16: #{_decoder_mlp_impl.1} parent=1 // pred_region
      %s31 = ssub.s32 2048, 2048
      %32 = vsyncadd [#allocation6], %s31
      %s33 = sshll.u32 [#allocation5], 4
      %s34 = int_to_ptr.vmem [resolvable:$true] %s33
      %39 = dma.hbm_to_vmem [thread:$0]  %s3, 2048, %s34, [#allocation6], 128, 128, 8
    $region17: #{_decoder_mlp_impl.1} parent=1 // pred_fallthru
      _
    // Predicated region
    $region18: #{_decoder_mlp_impl.1} parent=1 // pred_check
      _
    $region19: #{_decoder_mlp_impl.1} parent=1 // pred_check_branch
      %41 = sbr.rel (0) target = $region21
    $region20: #{_decoder_mlp_impl.1} parent=1 // pred_region
      _
    $region21: #{_decoder_mlp_impl.1} parent=1 // pred_fallthru
      _
    // Predicated region
    $region22: #{_decoder_mlp_impl.1} parent=1 // pred_check
      _
    $region23: #{_decoder_mlp_impl.1} parent=1 // pred_check_branch
      %43 = sbr.rel (0) target = $region25
    $region24: #{_decoder_mlp_impl.1} parent=1 // pred_region
      %44 = dma.done [#allocation4], 2048
    $region25: #{_decoder_mlp_impl.1} parent=1 // pred_fallthru
      _
    // Predicated region
    $region26: #{_decoder_mlp_impl.1} parent=1 // pred_check
      _
    $region27: #{_decoder_mlp_impl.1} parent=1 // pred_check_branch
      %46 = sbr.rel (0) target = $region29
    $region28: #{_decoder_mlp_impl.1} parent=1 // pred_region
      %47 = dma.done [#allocation6], 2048
    $region29: #{_decoder_mlp_impl.1} parent=1 // pred_fallthru
      _
    %v48 = vld [vmem:[%s0] sm:$0xff]
    %v49 = vld [vmem:[%s0 + $0x8] sm:$0xff]
    %v50 = vld [vmem:[#allocation3] sm:$0xff]
    %v51 = vld [vmem:[#allocation3 + $0x8] sm:$0xff]
    %v52 = vld [vmem:[#allocation3 + $0x10] sm:$0xff]
    %v53 = vld [vmem:[#allocation3 + $0x18] sm:$0xff]
    %v54 = vld [vmem:[#allocation3 + $0x20] sm:$0xff]
    %v55 = vld [vmem:[#allocation3 + $0x28] sm:$0xff]
    %v56 = vld [vmem:[#allocation3 + $0x30] sm:$0xff]
    %v57 = vld [vmem:[#allocation3 + $0x38] sm:$0xff]
    %v58 = vld [vmem:[#allocation3 + $0x40] sm:$0xff]
    %v59 = vld [vmem:[#allocation3 + $0x48] sm:$0xff]
    %v60 = vld [vmem:[#allocation3 + $0x50] sm:$0xff]
    %v61 = vld [vmem:[#allocation3 + $0x58] sm:$0xff]
    %v62 = vld [vmem:[#allocation3 + $0x60] sm:$0xff]
    %v63 = vld [vmem:[#allocation3 + $0x68] sm:$0xff]
    %v64 = vld [vmem:[#allocation3 + $0x70] sm:$0xff]
    %v65 = vld [vmem:[#allocation3 + $0x78] sm:$0xff]
    %v66 = vld [vmem:[%s2] sm:$0x1]
    %v68 = vlaneseq
    %v69 = vshrl.u32 %v68, 7
    %v70 = vsub.s32 0, %v69
    %v71 = vrot.slane %v66, %v70
    %73 = vmatprep.subr.mxu0 0.0
    %74 = vmatpush1.msra.mxu0 %v65
    %75 = vmatprep.subr.mxu0 0.0
    %76 = vmatpush1.msra.mxu0 %v64
    %77 = vmatprep.subr.mxu0 0.0
    %78 = vmatpush1.msra.mxu0 %v63
    %79 = vmatprep.subr.mxu0 0.0
    %80 = vmatpush1.msra.mxu0 %v62
    %81 = vmatprep.subr.mxu0 0.0
    %82 = vmatpush1.msra.mxu0 %v61
    %83 = vmatprep.subr.mxu0 0.0
    %84 = vmatpush1.msra.mxu0 %v60
    %85 = vmatprep.subr.mxu0 0.0
    %86 = vmatpush1.msra.mxu0 %v59
    %87 = vmatprep.subr.mxu0 0.0
    %88 = vmatpush1.msra.mxu0 %v58
    %89 = vmatprep.subr.mxu0 0.0
    %90 = vmatpush1.msra.mxu0 %v57
    %91 = vmatprep.subr.mxu0 0.0
    %92 = vmatpush1.msra.mxu0 %v56
    %93 = vmatprep.subr.mxu0 0.0
    %94 = vmatpush1.msra.mxu0 %v55
    %95 = vmatprep.subr.mxu0 0.0
    %96 = vmatpush1.msra.mxu0 %v54
    %97 = vmatprep.subr.mxu0 0.0
    %98 = vmatpush1.msra.mxu0 %v53
    %99 = vmatprep.subr.mxu0 0.0
    %100 = vmatpush1.msra.mxu0 %v52
    %101 = vmatprep.subr.mxu0 0.0
    %102 = vmatpush1.msra.mxu0 %v51
    %103 = vmatprep.subr.mxu0 0.0
    %104 = vmatpush1.msra.mxu0 %v50
    %105 = vmatprep.subr.mxu0 0.0
    %106 = vmatpush2.msra.mxu0 0.0
    %107 = vmatprep.subr.mxu0 0.0
    %108 = vmatpush2.msra.mxu0 0.0
    %109 = vmatprep.subr.mxu0 0.0
    %110 = vmatpush2.msra.mxu0 0.0
    %111 = vmatprep.subr.mxu0 0.0
    %112 = vmatpush2.msra.mxu0 0.0
    %113 = vmatprep.subr.mxu0 0.0
    %114 = vmatpush2.msra.mxu0 0.0
    %115 = vmatprep.subr.mxu0 0.0
    %116 = vmatpush2.msra.mxu0 0.0
    %117 = vmatprep.subr.mxu0 0.0
    %118 = vmatpush2.msra.mxu0 0.0
    %119 = vmatprep.subr.mxu0 0.0
    %120 = vmatpush2.msra.mxu0 0.0
    %121 = vmatprep.subr.mxu0 0.0
    %122 = vmatpush2.msra.mxu0 0.0
    %123 = vmatprep.subr.mxu0 0.0
    %124 = vmatpush2.msra.mxu0 0.0
    %125 = vmatprep.subr.mxu0 0.0
    %126 = vmatpush2.msra.mxu0 0.0
    %127 = vmatprep.subr.mxu0 0.0
    %128 = vmatpush2.msra.mxu0 0.0
    %129 = vmatprep.subr.mxu0 0.0
    %130 = vmatpush2.msra.mxu0 0.0
    %131 = vmatprep.subr.mxu0 0.0
    %132 = vmatpush2.msra.mxu0 0.0
    %133 = vmatprep.subr.mxu0 0.0
    %134 = vmatpush2.msra.mxu0 0.0
    %135 = vmatprep.subr.mxu0 0.0
    %136 = vmatpush2.msra.mxu0 0.0
    %137 = vmatprep.mubr.f32.mxu0 0.0
    %138 = vmatmul.mubr.f32.gmra.mxu0 %v48
    %v139 = vpop.f32.mrf.mxu0
    %v140 = vadd.f32 %v71, %v139
    %v141 = vpop.f32.mrf.mxu0
    %142 = vmatprep.mubr.f32.mxu0 0.0
    %143 = vmatmul.mubr.f32.gmra.mxu0 %v49
    %v144 = vpop.f32.mrf.mxu0
    %v145 = vadd.f32 %v71, %v144
    %v146 = vpop.f32.mrf.mxu0
    %147 = vdwg.mxu0
    %v148 = vmul.f32 %v140, 0.5
    %v149 = vmul.f32 %v145, 0.5
    %v150 = vmul.f32 %v140, 0.044715
    %v151 = vmul.f32 %v145, 0.044715
    %v152 = vmul.f32 %v150, %v140
    %v153 = vmul.f32 %v151, %v145
    %v154 = vmul.f32 %v152, %v140
    %v155 = vmul.f32 %v153, %v145
    %v156 = vadd.f32 %v140, %v154
    %v157 = vadd.f32 %v145, %v155
    %v158 = vmul.f32 %v156, 0.7978846
    %v159 = vmul.f32 %v157, 0.7978846
    %v160 = vtanh.pop %v158
    %v161 = vtanh.pop %v159
    %v162 = vadd.f32 %v160, 1.0
    %v163 = vadd.f32 %v161, 1.0
    %v164 = vmul.f32 %v148, %v162
    %v165 = vmul.f32 %v149, %v163
    %v166 = vld [vmem:[#allocation5] sm:$0xff]
    %v167 = vld [vmem:[#allocation5 + $0x8] sm:$0xff]
    %v168 = vld [vmem:[#allocation5 + $0x10] sm:$0xff]
    %v169 = vld [vmem:[#allocation5 + $0x18] sm:$0xff]
    %v170 = vld [vmem:[#allocation5 + $0x20] sm:$0xff]
    %v171 = vld [vmem:[#allocation5 + $0x28] sm:$0xff]
    %v172 = vld [vmem:[#allocation5 + $0x30] sm:$0xff]
    %v173 = vld [vmem:[#allocation5 + $0x38] sm:$0xff]
    %v174 = vld [vmem:[#allocation5 + $0x40] sm:$0xff]
    %v175 = vld [vmem:[#allocation5 + $0x48] sm:$0xff]
    %v176 = vld [vmem:[#allocation5 + $0x50] sm:$0xff]
    %v177 = vld [vmem:[#allocation5 + $0x58] sm:$0xff]
    %v178 = vld [vmem:[#allocation5 + $0x60] sm:$0xff]
    %v179 = vld [vmem:[#allocation5 + $0x68] sm:$0xff]
    %v180 = vld [vmem:[#allocation5 + $0x70] sm:$0xff]
    %v181 = vld [vmem:[#allocation5 + $0x78] sm:$0xff]
    %182 = vmatprep.subr.mxu0 0.0
    %183 = vmatpush1.msra.mxu0 %v181
    %184 = vmatprep.subr.mxu0 0.0
    %185 = vmatpush1.msra.mxu0 %v180
    %186 = vmatprep.subr.mxu0 0.0
    %187 = vmatpush1.msra.mxu0 %v179
    %188 = vmatprep.subr.mxu0 0.0
    %189 = vmatpush1.msra.mxu0 %v178
    %190 = vmatprep.subr.mxu0 0.0
    %191 = vmatpush1.msra.mxu0 %v177
    %192 = vmatprep.subr.mxu0 0.0
    %193 = vmatpush1.msra.mxu0 %v176
    %194 = vmatprep.subr.mxu0 0.0
    %195 = vmatpush1.msra.mxu0 %v175
    %196 = vmatprep.subr.mxu0 0.0
    %197 = vmatpush1.msra.mxu0 %v174
    %198 = vmatprep.subr.mxu0 0.0
    %199 = vmatpush1.msra.mxu0 %v173
    %200 = vmatprep.subr.mxu0 0.0
    %201 = vmatpush1.msra.mxu0 %v172
    %202 = vmatprep.subr.mxu0 0.0
    %203 = vmatpush1.msra.mxu0 %v171
    %204 = vmatprep.subr.mxu0 0.0
    %205 = vmatpush1.msra.mxu0 %v170
    %206 = vmatprep.subr.mxu0 0.0
    %207 = vmatpush1.msra.mxu0 %v169
    %208 = vmatprep.subr.mxu0 0.0
    %209 = vmatpush1.msra.mxu0 %v168
    %210 = vmatprep.subr.mxu0 0.0
    %211 = vmatpush1.msra.mxu0 %v167
    %212 = vmatprep.subr.mxu0 0.0
    %213 = vmatpush1.msra.mxu0 %v166
    %214 = vmatprep.subr.mxu0 0.0
    %215 = vmatpush2.msra.mxu0 0.0
    %216 = vmatprep.subr.mxu0 0.0
    %217 = vmatpush2.msra.mxu0 0.0
    %218 = vmatprep.subr.mxu0 0.0
    %219 = vmatpush2.msra.mxu0 0.0
    %220 = vmatprep.subr.mxu0 0.0
    %221 = vmatpush2.msra.mxu0 0.0
    %222 = vmatprep.subr.mxu0 0.0
    %223 = vmatpush2.msra.mxu0 0.0
    %224 = vmatprep.subr.mxu0 0.0
    %225 = vmatpush2.msra.mxu0 0.0
    %226 = vmatprep.subr.mxu0 0.0
    %227 = vmatpush2.msra.mxu0 0.0
    %228 = vmatprep.subr.mxu0 0.0
    %229 = vmatpush2.msra.mxu0 0.0
    %230 = vmatprep.subr.mxu0 0.0
    %231 = vmatpush2.msra.mxu0 0.0
    %232 = vmatprep.subr.mxu0 0.0
    %233 = vmatpush2.msra.mxu0 0.0
    %234 = vmatprep.subr.mxu0 0.0
    %235 = vmatpush2.msra.mxu0 0.0
    %236 = vmatprep.subr.mxu0 0.0
    %237 = vmatpush2.msra.mxu0 0.0
    %238 = vmatprep.subr.mxu0 0.0
    %239 = vmatpush2.msra.mxu0 0.0
    %240 = vmatprep.subr.mxu0 0.0
    %241 = vmatpush2.msra.mxu0 0.0
    %242 = vmatprep.subr.mxu0 0.0
    %243 = vmatpush2.msra.mxu0 0.0
    %244 = vmatprep.subr.mxu0 0.0
    %245 = vmatpush2.msra.mxu0 0.0
    %246 = vmatprep.mubr.f32.mxu0 0.0
    %247 = vmatmul.mubr.f32.gmra.mxu0 %v164
    %v248 = vpop.f32.mrf.mxu0
    %v249 = vadd.f32 0.0, %v248
    %v250 = vpop.f32.mrf.mxu0
    %251 = vmatprep.mubr.f32.mxu0 0.0
    %252 = vmatmul.mubr.f32.gmra.mxu0 %v165
    %v253 = vpop.f32.mrf.mxu0
    %v254 = vadd.f32 0.0, %v253
    %v255 = vpop.f32.mrf.mxu0
    %256 = vdwg.mxu0
    %p257 = scmp.eq.s32.totalorder 0, 0
    // Predicated region
    $region30: #{_decoder_mlp_impl.1} parent=1 // pred_check
      %p258 = pneg %p257
    $region31: #{_decoder_mlp_impl.1} parent=1 // pred_check_branch
      %260 = sbr.rel (%p258) target = $region33
    $region32: #{_decoder_mlp_impl.1} parent=1 // pred_region
      %261 = vst [vmem:[#allocation2] sm:$0xff] %v249
      %262 = vst [vmem:[#allocation2 + $0x8] sm:$0xff] %v254
    $region33: #{_decoder_mlp_impl.1} parent=1 // pred_fallthru
      _
    %p263 = scmp.ne.s32.totalorder 0, 0
    // Predicated region
    $region34: #{_decoder_mlp_impl.1} parent=1 // pred_check
      %p264 = pneg %p263
    $region35: #{_decoder_mlp_impl.1} parent=1 // pred_check_branch
      %266 = sbr.rel (%p264) target = $region37
    $region36: #{_decoder_mlp_impl.1} parent=1 // pred_region
      %v267 = vld [vmem:[#allocation2] sm:$0xff]
      %v268 = vld [vmem:[#allocation2 + $0x8] sm:$0xff]
      %v269 = vadd.f32 %v267, %v249
      %v270 = vadd.f32 %v268, %v254
      %271 = vst [vmem:[#allocation2] sm:$0xff] %v269
      %272 = vst [vmem:[#allocation2 + $0x8] sm:$0xff] %v270
    $region37: #{_decoder_mlp_impl.1} parent=1 // pred_fallthru
      _
    // Predicated region
    $region38: #{_decoder_mlp_impl.1} parent=1 // pred_check
      %p273 = pneg %p257
    $region39: #{_decoder_mlp_impl.1} parent=1 // pred_check_branch
      %275 = sbr.rel (%p273) target = $region41
    $region40: #{_decoder_mlp_impl.1} parent=1 // pred_region
      %v276 = vld [vmem:[#allocation2] sm:$0xff]
      %v277 = vld [vmem:[#allocation2 + $0x8] sm:$0xff]
      %v278 = vld [vmem:[%s4] sm:$0x1]
      %v280 = vlaneseq
      %v281 = vshrl.u32 %v280, 7
      %v282 = vsub.s32 0, %v281
      %v283 = vrot.slane %v278, %v282
      %v285 = vadd.f32 %v276, %v283
      %v286 = vadd.f32 %v277, %v283
      %287 = vst [vmem:[%s5] sm:$0xff] %v285
      %288 = vst [vmem:[%s5 + $0x8] sm:$0xff] %v286
    $region41: #{_decoder_mlp_impl.1} parent=1 // pred_fallthru
      _
    // Predicated region
    $region42: #{_decoder_mlp_impl.1} parent=1 // pred_check
      _
    $region43: #{_decoder_mlp_impl.1} parent=1 // pred_check_branch
      %290 = sbr.rel (0) target = $region45
    $region44: #{_decoder_mlp_impl.1} parent=1 // pred_region
      _
    $region45: #{_decoder_mlp_impl.1} parent=1 // pred_fallthru
      _
    // Predicated region
    $region46: #{_decoder_mlp_impl.1} parent=1 // pred_check
      _
    $region47: #{_decoder_mlp_impl.1} parent=1 // pred_check_branch
      %292 = sbr.rel (0) target = $region49
    $region48: #{_decoder_mlp_impl.1} parent=1 // pred_region
      _
    $region49: #{_decoder_mlp_impl.1} parent=1 // pred_fallthru
      _
    %293 = vsyncpa [#allocation4], 1
    %294 = vsyncpa [#allocation6], 1

</llo_original>
